<compile_context>
chip_gen: v6e
topology: v6e:2x2x1
jax: 0.10.0
libtpu: 0.0.40
codegen_flags: <defaults>
</compile_context>

<pallas_src>
import functools

import jax
import jax.numpy as jnp
from jax.experimental import pallas as pl
from jax.experimental.pallas import tpu as pltpu

_LANE = 128
_MIB = 1024 * 1024


def _rmsnorm_kernel(x_ref, w_ref, o_ref, *, eps: float, inv_dim: float):
    # x_ref: (row_tile, dim) input block. The last dim is the full hidden size
    #        (possibly not a multiple of 128) and the trailing row block may be
    #        partial; Mosaic masks the ragged lane reduce and the OOB stores.
    # w_ref: (1, dim) weight, resident across all grid steps (constant index).
    # o_ref: (row_tile, dim) output block.
    x = x_ref[...].astype(jnp.float32)                      # x.float()
    ms = jnp.sum(x * x, axis=-1, keepdims=True) * inv_dim   # .pow(2).mean(-1)
    inv = jax.lax.rsqrt(ms + eps)                           # rsqrt(. + eps)
    # Recompute the fp32 upcast instead of reusing `x` so a full fp32 copy of
    # the tile never needs to stay live across the reduction (keeps the VMEM
    # footprint estimate in _pick_tiling honest).
    normed = (x_ref[...].astype(jnp.float32) * inv).astype(x_ref.dtype)
    # NOTE: casting back to the input dtype before the weight multiply is
    # required for parity with PyTorch's `.type_as(x)` — do not "optimize" it.
    o_ref[...] = (normed * w_ref[...]).astype(o_ref.dtype)  # * self.weight


def _sublane(dtype) -> int:
    # Native sublane packing: 8 rows for 4-byte, 16 for 2-byte, 32 for 1-byte.
    return max(8, 32 // jnp.dtype(dtype).itemsize)


def _chip_info():
    try:
        return pltpu.get_tpu_info()
    except Exception:
        return None


def _num_tensorcores(info) -> int:
    """Best-effort per-chip TensorCore count (2 on v7x-class parts)."""
    if info is None:
        return 1
    for attr in ("num_tensorcores", "tensorcores_per_chip",
                 "num_cores_per_chip"):
        v = getattr(info, attr, None)
        if isinstance(v, int) and v > 0:
            return v
    ver = getattr(info, "chip_version", None)
    name = str(getattr(ver, "name", ver) or "")
    return 2 if "7" in name else 1


def _vmem_capacity_bytes(info) -> int:
    """Per-TensorCore VMEM capacity, clamped defensively."""
    cap = 64 * _MIB  # conservative fallback (v7x per-TensorCore)
    if info is not None:
        v = int(getattr(info, "vmem_capacity_bytes", 0) or 0)
        if v > 0:
            cap = v
        # Guard against a per-chip report on 2-TC parts: a single TensorCore
        # on v7x only owns 64 MiB.
        ver = getattr(info, "chip_version", None)
        name = str(getattr(ver, "name", ver) or "")
        if _num_tensorcores(info) >= 2 or "7" in name:
            cap = min(cap, 64 * _MIB)
    return min(cap, 128 * _MIB)


def _pick_tiling(rows: int, dim: int, in_dtype, out_dtype):
    """Pick (row_tile, vmem_limit_bytes, num_tensorcores)."""
    sub = _sublane(in_dtype)
    info = _chip_info()
    cap = _vmem_capacity_bytes(info)
    n_tc = _num_tensorcores(info)
    # ~75% of per-TensorCore VMEM: 96 MiB on 128 MiB parts, 48 MiB on v7x.
    vmem_limit = int(min(cap * 3 // 4, 100 * _MIB))

    in_b = jnp.dtype(in_dtype).itemsize
    out_b = jnp.dtype(out_dtype).itemsize
    dim_p = pl.cdiv(dim, _LANE) * _LANE   # VMEM tiles are lane-padded anyway
    # Double-buffered input + output tiles plus ~1 fp32 temp per element
    # (Mosaic streams the elementwise/reduce chain vreg-at-a-time; only the
    # (row_tile, 1) reduction result persists).
    per_row_bytes = dim_p * (2 * in_b + 2 * out_b + 4)
    budget = int(vmem_limit * 0.8)

    row_tile = max(sub, min(budget // per_row_bytes, 1024))
    row_tile = (row_tile // sub) * sub

    if rows <= sub:
        return rows, vmem_limit, n_tc          # single full-extent row block
    row_tile = min(row_tile, (rows // sub) * sub)

    # Only on 2-TensorCore (megacore-style) parts: ensure enough grid steps
    # (>= 2 per core) for balanced sharding of the "parallel" row axis. On
    # 1-TC v5e/v6e extra steps are pure per-step overhead, so skip this.
    if n_tc >= 2:
        min_steps = 2 * n_tc
        if pl.cdiv(rows, row_tile) < min_steps:
            balanced = max(sub, pl.cdiv(pl.cdiv(rows, min_steps), sub) * sub)
            row_tile = max(sub, min(row_tile, balanced))
    return row_tile, vmem_limit, n_tc


def rms_norm(x: jax.Array, weight: jax.Array, eps: float = 1e-6,
             row_tile: int | None = None, out_dtype=None) -> jax.Array:
    """RMSNorm over the last axis of x, matching the PyTorch reference.

    out_dtype=None (default) reproduces PyTorch's type promotion of
    `normed.type_as(x) * weight`; pass out_dtype=x.dtype for a non-promoting
    fast path (halves the output HBM traffic for bf16 x / fp32 weight).
    """
    orig_shape = x.shape
    dim = orig_shape[-1]
    assert weight.shape == (dim,), f"weight shape {weight.shape} != ({dim},)"

    rows = 1
    for s in orig_shape[:-1]:
        rows *= int(s)
    rows = max(rows, 1)

    if out_dtype is None:
        out_dtype = jnp.promote_types(x.dtype, weight.dtype)
    out_dtype = jnp.dtype(out_dtype)

    sub = _sublane(x.dtype)
    auto_tile, vmem_limit, _ = _pick_tiling(rows, dim, x.dtype, out_dtype)
    if row_tile is None:
        row_tile = auto_tile
    else:
        row_tile = int(row_tile)
        if rows <= sub:
            row_tile = rows
        else:
            row_tile = max(sub, (row_tile // sub) * sub)
            row_tile = min(row_tile, (rows // sub) * sub)

    # No wrapper-side padding or slicing: the hidden axis is passed at its
    # true size (full-array last dim is exempt from the 128 rule) and ragged
    # row counts are handled by the grid's partial trailing block. Garbage
    # rows in the last input block only produce output rows that are masked
    # on store — safe because the reduction is strictly per-row.
    x2d = x.reshape(rows, dim)
    w2d = weight.astype(out_dtype).reshape(1, dim)

    grid = (pl.cdiv(rows, row_tile),)
    out = pl.pallas_call(
        functools.partial(_rmsnorm_kernel, eps=float(eps), inv_dim=1.0 / dim),
        out_shape=jax.ShapeDtypeStruct((rows, dim), out_dtype),
        grid_spec=pltpu.PrefetchScalarGridSpec(
            num_scalar_prefetch=0,
            grid=grid,
            in_specs=[
                pl.BlockSpec((row_tile, dim), lambda i: (i, 0)),
                # Weight: constant index map, stays resident in VMEM. Its
                # double-buffer overhead is only ~2*dim*itemsize bytes, so a
                # Buffered(1) override is not worth the lowering risk here.
                pl.BlockSpec((1, dim), lambda i: (0, 0)),
            ],
            out_specs=pl.BlockSpec((row_tile, dim), lambda i: (i, 0)),
        ),
        compiler_params=pltpu.CompilerParams(
            dimension_semantics=("parallel",),
            vmem_limit_bytes=vmem_limit),
    )(x2d, w2d)
    return out.reshape(orig_shape)


def rms_norm_ref(x, weight, eps=1e-6):
    xf = x.astype(jnp.float32)
    inv = jax.lax.rsqrt(jnp.mean(xf * xf, axis=-1, keepdims=True) + eps)
    return (xf * inv).astype(x.dtype) * weight


if __name__ == "__main__":
    key = jax.random.PRNGKey(0)
    batch, seq, dim = 2, 8, 128

    x = jax.random.normal(key, (batch, seq, dim), dtype=jnp.float32)
    # Deterministic parameter init matching nn.Parameter(torch.ones(dim)).
    weight = jnp.ones((dim,), dtype=jnp.float32)

    out = jax.block_until_ready(rms_norm(x, weight, eps=1e-6))
    ref = rms_norm_ref(x, weight, eps=1e-6)
    assert out.shape == x.shape and out.dtype == ref.dtype
    assert jnp.allclose(out, ref, atol=1e-5, rtol=1e-5)

    # Ragged rows (15) and ragged hidden dim (96): no wrapper-side padding,
    # the partial trailing block + masked stores handle it inside the kernel.
    x2 = jax.random.normal(jax.random.PRNGKey(1), (3, 5, 96), dtype=jnp.float32)
    w2 = jnp.ones((96,), dtype=jnp.float32)
    out2 = jax.block_until_ready(rms_norm(x2, w2, eps=1e-6))
    assert out2.shape == x2.shape
    assert jnp.allclose(out2, rms_norm_ref(x2, w2, eps=1e-6),
                        atol=1e-5, rtol=1e-5)

    # Mixed precision: bf16 activations + fp32 weight (promoting default).
    x3 = jax.random.normal(jax.random.PRNGKey(2), (batch, seq, dim),
                           dtype=jnp.bfloat16)
    w3 = jax.random.normal(jax.random.PRNGKey(3), (dim,), dtype=jnp.float32)
    out3 = jax.block_until_ready(rms_norm(x3, w3, eps=1e-6))
    ref3 = rms_norm_ref(x3, w3, eps=1e-6)
    assert out3.dtype == jnp.float32
    assert jnp.allclose(out3, ref3, atol=2e-2, rtol=2e-2)

    # Opt-in non-promoting fast path (bf16 out): shape/dtype smoke test.
    out4 = jax.block_until_ready(rms_norm(x3, w3, eps=1e-6,
                                          out_dtype=jnp.bfloat16))
    assert out4.shape == x3.shape and out4.dtype == jnp.bfloat16

    print("KERNEL_OK")
</pallas_src>

<mosaic_0001>
module attributes {stable_mosaic.version = 11 : i64} {
  func.func @_rmsnorm_kernel(%arg0: i32, %arg1: memref<16x128xf32, #tpu.memory_space<vmem>>, %arg2: memref<1x128xf32, #tpu.memory_space<vmem>>, %arg3: memref<16x128xf32, #tpu.memory_space<vmem>>) attributes {dimension_semantics = [#tpu.dimension_semantics<parallel>], iteration_bounds = array<i64: 1>, scalar_prefetch = 0 : i64, scratch_operands = 0 : i64, tpu.core_type = #tpu.core_type<tc>, window_params = [{transform_indices = @transform_0, window_bounds = array<i64: 16, 128>}, {pipeline_mode = #tpu.pipeline_mode<synchronous>, transform_indices = @transform_1, window_bounds = array<i64: 1, 128>}, {transform_indices = @transform_2, window_bounds = array<i64: 16, 128>}]} {
    %c0 = arith.constant 0 : index
    %c0_0 = arith.constant 0 : index
    %0 = vector.load %arg1[%c0, %c0_0] : memref<16x128xf32, #tpu.memory_space<vmem>>, vector<16x128xf32>
    %1 = arith.mulf %0, %0 : vector<16x128xf32>
    %cst = arith.constant dense<0.000000e+00> : vector<16xf32>
    %2 = vector.multi_reduction <add>, %1, %cst [1] : vector<16x128xf32> to vector<16xf32>
    %3 = vector.shape_cast %2 : vector<16xf32> to vector<16x1xf32>
    %cst_1 = arith.constant 7.812500e-03 : f32
    %4 = vector.broadcast %cst_1 : f32 to vector<16x1xf32>
    %5 = arith.mulf %3, %4 : vector<16x1xf32>
    %cst_2 = arith.constant 9.99999997E-7 : f32
    %6 = vector.broadcast %cst_2 : f32 to vector<16x1xf32>
    %7 = arith.addf %5, %6 : vector<16x1xf32>
    %8 = math.rsqrt %7 : vector<16x1xf32>
    %c0_3 = arith.constant 0 : index
    %c0_4 = arith.constant 0 : index
    %9 = vector.load %arg1[%c0_3, %c0_4] : memref<16x128xf32, #tpu.memory_space<vmem>>, vector<16x128xf32>
    %10 = vector.broadcast %8 : vector<16x1xf32> to vector<16x128xf32>
    %11 = arith.mulf %9, %10 : vector<16x128xf32>
    %c0_5 = arith.constant 0 : index
    %c0_6 = arith.constant 0 : index
    %12 = vector.load %arg2[%c0_5, %c0_6] : memref<1x128xf32, #tpu.memory_space<vmem>>, vector<1x128xf32>
    %13 = vector.broadcast %12 : vector<1x128xf32> to vector<16x128xf32>
    %14 = arith.mulf %11, %13 : vector<16x128xf32>
    %c0_7 = arith.constant 0 : index
    %c0_8 = arith.constant 0 : index
    %15 = vector.load %arg3[%c0_7, %c0_8] : memref<16x128xf32, #tpu.memory_space<vmem>>, vector<16x128xf32>
    tpu.vector_store %arg3[%c0_7, %c0_8], %14 {strides = array<i32>} : memref<16x128xf32, #tpu.memory_space<vmem>>, vector<16x128xf32>,
    return
  }
  func.func @transform_0(%arg0: i32) -> (i32, i32) {
    %c0_i32 = arith.constant 0 : i32
    %c0_i32_0 = arith.constant 0 : i32
    return %arg0, %c0_i32 : i32, i32
  }
  func.func @transform_1(%arg0: i32) -> (i32, i32) {
    %c0_i32 = arith.constant 0 : i32
    %c0_i32_0 = arith.constant 0 : i32
    %c0_i32_1 = arith.constant 0 : i32
    return %c0_i32, %c0_i32_0 : i32, i32
  }
  func.func @transform_2(%arg0: i32) -> (i32, i32) {
    %c0_i32 = arith.constant 0 : i32
    %c0_i32_0 = arith.constant 0 : i32
    return %arg0, %c0_i32 : i32, i32
  }
}

</mosaic_0001>

<llo_original>
// kernel: tpu_custom_call.1
$region0: #{tpu_custom_call.1}
  #allocation0 [shape = 'u32[]', space=smem, size = 0x4, offset = 0x4, fixed_abs, tag = 'smem constant byte address 0x4 - core index']
  #allocation1 [shape = 'u32[144,128]{1,0:T(1,128)}', space=vmem, size = 0x12000, scoped, tag = 'internal scratch']
  %s0 = inlined_call_operand.hbm [shape: f32[16,128], index: 0, kind: input, shape index: {}]
  %s1 = inlined_call_operand.vmem [shape: f32[1,128], index: 1, kind: input, shape index: {}]
  %s2 = inlined_call_operand.hbm [shape: f32[16,128], index: 2, kind: output, shape index: {}]
  %s3 = sld [smem:[#allocation0]]
  $region22: #{tpu_custom_call.1} parent=0
    _
  %s5 = ssub.s32 1, %s3
  %s6 = scalar_select 0, %s5, %s3
  $region1: #{tpu_custom_call.1} parent=0
    #allocation2 [shape = 'u8[8192]{0}', space=vmem, size = 0x2000, scoped, tag = 'input window, operand 0, single buffered']
    #allocation3 [shape = 's32[1]{0}', space=sflag, size = 0x4, scoped, tag = 'scoped memory for tpu_custom_call.1']
    #allocation4 [shape = 's32[1]{0}', space=sflag, size = 0x4, scoped, tag = 'scoped memory for tpu_custom_call.1']
    #allocation5 [shape = 'u8[8192]{0}', space=vmem, size = 0x2000, scoped, tag = 'output window, operand 0, single buffered']
    %7 = vsyncpa [#allocation3], 0
    %8 = vsyncpa [#allocation4], 0
    // Predicated region
    $region2: #{tpu_custom_call.1} parent=1 // pred_check
      _
    $region3: #{tpu_custom_call.1} parent=1 // pred_check_branch
      %10 = sbr.rel (0) target = $region5
    $region4: #{tpu_custom_call.1} parent=1 // pred_region
      %s12 = ssub.s32 256, 256
      %13 = vsyncadd [#allocation3], %s12
      %s14 = sshll.u32 [#allocation2], 4
      %s15 = int_to_ptr.vmem [resolvable:$true] %s14
      %20 = dma.hbm_to_vmem [thread:$0]  %s0, 256, %s15, [#allocation3], 128, 128, 8
    $region5: #{tpu_custom_call.1} parent=1 // pred_fallthru
      _
    // Predicated region
    $region6: #{tpu_custom_call.1} parent=1 // pred_check
      _
    $region7: #{tpu_custom_call.1} parent=1 // pred_check_branch
      %22 = sbr.rel (0) target = $region9
    $region8: #{tpu_custom_call.1} parent=1 // pred_region
      _
    $region9: #{tpu_custom_call.1} parent=1 // pred_fallthru
      _
    // Predicated region
    $region10: #{tpu_custom_call.1} parent=1 // pred_check
      _
    $region11: #{tpu_custom_call.1} parent=1 // pred_check_branch
      %24 = sbr.rel (0) target = $region13
    $region12: #{tpu_custom_call.1} parent=1 // pred_region
      %25 = dma.done [#allocation3], 256
    $region13: #{tpu_custom_call.1} parent=1 // pred_fallthru
      _
    %v26 = vld [vmem:[#allocation2] sm:$0xff]
    %v27 = vld [vmem:[#allocation2 + $0x8] sm:$0xff]
    %v28 = vmul.f32 %v26, %v26
    %v29 = vmul.f32 %v27, %v27
    %30 = vadd.xlane.f32.xlu0 %v28
    %v31 = vpop.xlane.xlu0 %30
    %32 = vadd.xlane.f32.xlu0 %v29
    %v33 = vpop.xlane.xlu0 %32
    %v34 = vmul.f32 %v31, 0.0078125
    %v35 = vmul.f32 %v33, 0.0078125
    %v36 = vadd.f32 %v34, 1e-06
    %v37 = vadd.f32 %v35, 1e-06
    %v38 = vrsqrt.pop %v36
    %v39 = vrsqrt.pop %v37
    %v40 = vmul.f32 %v26, %v38
    %v41 = vmul.f32 %v27, %v39
    %v42 = vld [vmem:[%s1] sm:$0x1]
    %v44 = vlaneseq
    %v45 = vshrl.u32 %v44, 7
    %v46 = vsub.s32 0, %v45
    %v47 = vrot.slane %v42, %v46
    %v49 = vmul.f32 %v40, %v47
    %v50 = vmul.f32 %v41, %v47
    %51 = vst [vmem:[#allocation5] sm:$0xff] %v49
    %52 = vst [vmem:[#allocation5 + $0x8] sm:$0xff] %v50
    // Predicated region
    $region14: #{tpu_custom_call.1} parent=1 // pred_check
      _
    $region15: #{tpu_custom_call.1} parent=1 // pred_check_branch
      %54 = sbr.rel (0) target = $region17
    $region16: #{tpu_custom_call.1} parent=1 // pred_region
      %s56 = ssub.s32 256, 256
      %57 = vsyncadd [#allocation4], %s56
      %s58 = sshll.u32 [#allocation5], 4
      %s59 = int_to_ptr.vmem [resolvable:$true] %s58
      %64 = dma.vmem_to_hbm [thread:$0]  %s59, 256, %s2, [#allocation4], 128, 128, 8
    $region17: #{tpu_custom_call.1} parent=1 // pred_fallthru
      _
    // Predicated region
    $region18: #{tpu_custom_call.1} parent=1 // pred_check
      _
    $region19: #{tpu_custom_call.1} parent=1 // pred_check_branch
      %66 = sbr.rel (0) target = $region21
    $region20: #{tpu_custom_call.1} parent=1 // pred_region
      %67 = dma.done [#allocation4], 256
    $region21: #{tpu_custom_call.1} parent=1 // pred_fallthru
      _
    %68 = vsyncpa [#allocation3], 1
    %69 = vsyncpa [#allocation4], 1

</llo_original>
